<compile_context>
chip_gen: v7x
topology: tpu7x:2x2x1
jax: 0.10.0
libtpu: 0.0.40
codegen_flags: <defaults>
</compile_context>

<pallas_src>
import functools
import math

import jax
import jax.numpy as jnp
from jax import lax
from jax.experimental import pallas as pl
from jax.experimental.pallas import tpu as pltpu

_MIB = 1024 * 1024


def _round_up(x: int, m: int) -> int:
    return (x + m - 1) // m * m


def _vmem_capacity_bytes() -> int:
    try:
        return int(pltpu.get_tpu_info().vmem_capacity_bytes)
    except Exception:
        return 64 * _MIB  # conservative (v7x per-core VMEM)


def _shrink_tile(tm: int) -> int:
    """Halve a token tile while keeping it a positive multiple of 8."""
    return max(8, (tm // 16) * 8)


def _choose_tm(n_tok, tile_tokens, per_tile_bytes, fixed_bytes, budget):
    tm = _round_up(min(max(tile_tokens, 8), _round_up(max(n_tok, 1), 8)), 8)
    # Shrink until the explicit VMEM footprint fits the budget.
    while tm > 8 and fixed_bytes + per_tile_bytes(tm) > budget:
        tm = _shrink_tile(tm)
    # Guarantee >= 2 grid steps so v7x's two TensorCores both get work.
    while tm > 8 and pl.cdiv(max(n_tok, 1), tm) < 2:
        tm = _shrink_tile(tm)
    return tm


# --------------------------------------------------------------------------- kernels


def _onehot_gather_kernel(idx_ref, table_ref, out_ref, *, vocab: int, scale: float):
    """A1: gather TM rows via a one-hot MXU matmul, fused with the sqrt(E) scale."""
    ids = idx_ref[...]                                             # (TM, 1) int32
    col = lax.broadcasted_iota(jnp.int32, (ids.shape[0], vocab), 1)
    onehot = (ids == col).astype(table_ref.dtype)                  # (TM, V)
    gathered = jnp.dot(onehot, table_ref[...],
                       preferred_element_type=jnp.float32)         # (TM, E) f32
    out_ref[...] = (gathered * jnp.float32(scale)).astype(out_ref.dtype)


def _rowread_gather_kernel(idx_ref, table_ref, out_ref, *, tm: int, scale: float):
    """A2: per-token dynamic-slice reads from the VMEM-resident table."""
    base = pl.program_id(0) * tm

    def body(t, carry):
        row = table_ref[pl.ds(idx_ref[base + t], 1), :]            # (1, E)
        out_ref[pl.ds(t, 1), :] = (row * jnp.float32(scale)).astype(out_ref.dtype)
        return carry

    lax.fori_loop(0, tm, body, 0)


def _dma_gather_kernel(idx_ref, table_hbm, out_ref, rows_vmem, sems, *,
                       tm: int, nflight: int, scale: float):
    """B: token-tiled manual row gather from HBM with nflight outstanding DMAs."""
    base = pl.program_id(0) * tm

    def start_row(r):
        pltpu.make_async_copy(table_hbm.at[pl.ds(idx_ref[base + r], 1), :],
                              rows_vmem.at[pl.ds(r, 1), :],
                              sems.at[r % nflight]).start()

    def wait_row(r):
        pltpu.make_async_copy(table_hbm.at[pl.ds(0, 1), :],
                              rows_vmem.at[pl.ds(0, 1), :],
                              sems.at[r % nflight]).wait()

    @pl.loop(0, nflight)
    def _prime(r):
        start_row(r)

    @pl.loop(0, tm)
    def _drain(r):
        wait_row(r)

        @pl.when(r + nflight < tm)
        def _():
            start_row(r + nflight)

    out_ref[...] = (rows_vmem[...] * jnp.float32(scale)).astype(out_ref.dtype)


# --------------------------------------------------------------------------- wrapper


def embedding_forward(indices: jax.Array, table: jax.Array, *,
                      tile_tokens: int = 512,
                      resident_table_bytes: int | None = None) -> jax.Array:
    """Pallas equivalent of Embedding.forward.

    indices: (B, S) int32 token ids
    table:   (V, E) embedding matrix
    returns: (B, S, E), scaled by sqrt(E)
    """
    B, S = indices.shape
    V, E = table.shape
    n_tok = B * S
    scale = float(math.sqrt(E))
    itemsize = table.dtype.itemsize
    table_bytes = V * E * itemsize

    flat_idx = indices.reshape(-1).astype(jnp.int32)

    vmem_cap = _vmem_capacity_bytes()
    vmem_cap_limit = (vmem_cap * 3) // 4                 # never ask for full capacity
    resident_budget = ((vmem_cap * 3) // 8 if resident_table_bytes is None
                       else int(resident_table_bytes))   # 24 MiB v7x, 48 MiB v5e/v6e
    headroom = 2 * _MIB                                   # compiler-internal scratch

    def pad_idx(tm):
        n_pad = _round_up(max(n_tok, tm), tm)
        if n_pad != n_tok:
            return jnp.pad(flat_idx, (0, n_pad - n_tok)), n_pad  # pad with valid id 0
        return flat_idx, n_pad

    if table_bytes <= resident_budget:
        # ------ Path A: table VMEM-resident (single copy via memory_space=VMEM). ----
        onehot_max_v = 256 if itemsize >= 4 else 512  # f32 matmul is multi-pass on MXU

        if V <= onehot_max_v:
            # -- A1: one-hot MXU matmul gather --
            def per_tile(tm):
                return (2 * tm * E * itemsize      # double-buffered output blocks
                        + 2 * tm * 128 * 4         # (tm, 1) idx blocks, lane-padded
                        + tm * V * 4)              # one-hot temporary
            tm = _choose_tm(n_tok, tile_tokens, per_tile,
                            table_bytes + headroom, vmem_cap_limit)
            idx_pad, n_pad = pad_idx(tm)
            idx2d = idx_pad.reshape(n_pad, 1)
            vmem_limit = int(min(max(table_bytes + headroom + per_tile(tm) + 2 * _MIB,
                                     16 * _MIB), vmem_cap_limit))
            kernel = functools.partial(_onehot_gather_kernel, vocab=V, scale=scale)
            out_flat = pl.pallas_call(
                kernel,
                out_shape=jax.ShapeDtypeStruct((n_tok, E), table.dtype),
                grid=(n_pad // tm,),
                in_specs=[
                    pl.BlockSpec((tm, 1), lambda i: (i, 0)),              # token ids
                    pl.BlockSpec(memory_space=pltpu.MemorySpace.VMEM),    # resident
                ],
                out_specs=pl.BlockSpec((tm, E), lambda i: (i, 0)),
                compiler_params=pltpu.CompilerParams(
                    dimension_semantics=("parallel",),
                    vmem_limit_bytes=vmem_limit,
                ),
            )(idx2d, table)
        else:
            # -- A2: direct row reads from the resident table --
            def per_tile(tm):
                return 2 * tm * E * itemsize       # double-buffered output blocks
            tm = _choose_tm(n_tok, tile_tokens, per_tile,
                            table_bytes + headroom, vmem_cap_limit)
            idx_pad, n_pad = pad_idx(tm)
            vmem_limit = int(min(max(table_bytes + headroom + per_tile(tm) + 2 * _MIB,
                                     16 * _MIB), vmem_cap_limit))
            kernel = functools.partial(_rowread_gather_kernel, tm=tm, scale=scale)
            out_flat = pl.pallas_call(
                kernel,
                out_shape=jax.ShapeDtypeStruct((n_tok, E), table.dtype),
                grid_spec=pltpu.PrefetchScalarGridSpec(
                    num_scalar_prefetch=1,                  # token ids -> SMEM
                    grid=(n_pad // tm,),
                    in_specs=[pl.BlockSpec(memory_space=pltpu.MemorySpace.VMEM)],
                    out_specs=pl.BlockSpec((tm, E), lambda i, idx: (i, 0)),
                ),
                compiler_params=pltpu.CompilerParams(
                    dimension_semantics=("parallel",),
                    vmem_limit_bytes=vmem_limit,
                ),
            )(idx_pad, table)

    else:
        # ------ Path B: table stays in HBM; token-tiled manual DMA gather. ----------
        def per_tile(tm):
            return 3 * tm * E * itemsize           # (tm,E) scratch + 2x output blocks
        tm = _choose_tm(n_tok, tile_tokens, per_tile, headroom, vmem_cap_limit)
        nflight = min(8, tm)                        # outstanding per-row DMAs
        idx_pad, n_pad = pad_idx(tm)
        vmem_limit = int(min(max(headroom + per_tile(tm) + 2 * _MIB, 16 * _MIB),
                             vmem_cap_limit))
        kernel = functools.partial(_dma_gather_kernel, tm=tm, nflight=nflight,
                                   scale=scale)
        out_flat = pl.pallas_call(
            kernel,
            out_shape=jax.ShapeDtypeStruct((n_tok, E), table.dtype),
            grid_spec=pltpu.PrefetchScalarGridSpec(
                num_scalar_prefetch=1,                      # token ids -> SMEM
                grid=(n_pad // tm,),
                in_specs=[pl.BlockSpec(memory_space=pl.ANY)],   # raw HBM table
                out_specs=pl.BlockSpec((tm, E), lambda i, idx: (i, 0)),
                scratch_shapes=[pltpu.VMEM((tm, E), table.dtype),
                                pltpu.SemaphoreType.DMA((nflight,))],
            ),
            compiler_params=pltpu.CompilerParams(
                dimension_semantics=("parallel",),
                vmem_limit_bytes=vmem_limit,
            ),
        )(idx_pad, table)

    return out_flat.reshape(B, S, E)


# --------------------------------------------------------------------------- main


if __name__ == "__main__":
    key = jax.random.PRNGKey(0)

    def check(vocab, embed, batch, seq, **kw):
        k_tbl, k_idx = jax.random.split(jax.random.fold_in(key, vocab + embed))
        # torch.nn.Embedding default init is N(0, 1) — match it deterministically.
        table = jax.random.normal(k_tbl, (vocab, embed), dtype=jnp.float32)
        idx = jax.random.randint(k_idx, (batch, seq), 0, vocab, dtype=jnp.int32)
        out = jax.block_until_ready(embedding_forward(idx, table, **kw))
        ref = jnp.take(table, idx, axis=0) * math.sqrt(embed)
        assert out.shape == (batch, seq, embed)
        assert jnp.allclose(out, ref, atol=1e-2, rtol=1e-2), (
            f"V={vocab} E={embed}: max abs diff {jnp.max(jnp.abs(out - ref))}")

    # Module-consistent small shapes (vocab=32, embed=128, batch=2, seq=8):
    # exercises the one-hot MXU path (A1).
    check(32, 128, 2, 8)
    # Mid-size vocab: exercises the resident-table row-read path (A2).
    check(512, 128, 2, 8)
    # Force the large-table path (B): token-tiled manual DMA gather from HBM.
    check(64, 128, 2, 8, resident_table_bytes=0)

    print("KERNEL_OK")
</pallas_src>

<mosaic_0001>
module attributes {stable_mosaic.version = 11 : i64} {
  func.func @_onehot_gather_kernel(%arg0: i32, %arg1: memref<8x1xi32, #tpu.memory_space<vmem>>, %arg2: memref<32x128xf32, #tpu.memory_space<vmem>>, %arg3: memref<8x128xf32, #tpu.memory_space<vmem>>) attributes {dimension_semantics = [#tpu.dimension_semantics<parallel>], iteration_bounds = array<i64: 2>, scalar_prefetch = 0 : i64, scratch_operands = 0 : i64, tpu.core_type = #tpu.core_type<tc>, window_params = [{transform_indices = @transform_0, window_bounds = array<i64: 8, 1>}, {pipeline_mode = #tpu.pipeline_mode<synchronous>, transform_indices = @transform_1, window_bounds = array<i64: 32, 128>}, {transform_indices = @transform_2, window_bounds = array<i64: 8, 128>}]} {
    %c0 = arith.constant 0 : index
    %c0_0 = arith.constant 0 : index
    %0 = vector.load %arg1[%c0, %c0_0] : memref<8x1xi32, #tpu.memory_space<vmem>>, vector<8x1xi32>
    %1 = tpu.iota {dimensions = array<i32: 1>} : vector<8x32xi32>
    %2 = vector.broadcast %0 : vector<8x1xi32> to vector<8x32xi32>
    %3 = arith.cmpi eq, %2, %1 : vector<8x32xi32>
    %4 = arith.extui %3 : vector<8x32xi1> to vector<8x32xi32>
    %5 = arith.sitofp %4 : vector<8x32xi32> to vector<8x32xf32>
    %c0_1 = arith.constant 0 : index
    %c0_2 = arith.constant 0 : index
    %6 = vector.load %arg2[%c0_1, %c0_2] : memref<32x128xf32, #tpu.memory_space<vmem>>, vector<32x128xf32>
    %cst = arith.constant dense<0.000000e+00> : vector<8x128xf32>
    %7 = tpu.matmul %5, %6, %cst {dimension_numbers = #tpu.dot_dimension_numbers<[1], [0], [0], [1], [0, 0, 1, 1], [], []>} : vector<8x32xf32>, vector<32x128xf32>, vector<8x128xf32> -> vector<8x128xf32>
    %cst_3 = arith.constant 11.3137083 : f32
    %8 = vector.broadcast %cst_3 : f32 to vector<8x128xf32>
    %9 = arith.mulf %7, %8 : vector<8x128xf32>
    %c0_4 = arith.constant 0 : index
    %c0_5 = arith.constant 0 : index
    %10 = vector.load %arg3[%c0_4, %c0_5] : memref<8x128xf32, #tpu.memory_space<vmem>>, vector<8x128xf32>
    tpu.vector_store %arg3[%c0_4, %c0_5], %9 {strides = array<i32>} : memref<8x128xf32, #tpu.memory_space<vmem>>, vector<8x128xf32>,
    return
  }
  func.func @transform_0(%arg0: i32) -> (i32, i32) {
    %c0_i32 = arith.constant 0 : i32
    %c0_i32_0 = arith.constant 0 : i32
    return %arg0, %c0_i32 : i32, i32
  }
  func.func @transform_1(%arg0: i32) -> (i32, i32) {
    %c0_i32 = arith.constant 0 : i32
    %c0_i32_0 = arith.constant 0 : i32
    %c0_i32_1 = arith.constant 0 : i32
    return %c0_i32, %c0_i32_0 : i32, i32
  }
  func.func @transform_2(%arg0: i32) -> (i32, i32) {
    %c0_i32 = arith.constant 0 : i32
    %c0_i32_0 = arith.constant 0 : i32
    return %arg0, %c0_i32 : i32, i32
  }
}

</mosaic_0001>

<llo_original>
// kernel: tpu_custom_call.1
$region0: #{tpu_custom_call.1}
  #allocation0 [shape = 'u32[]', space=smem, size = 0x4, offset = 0x4, fixed_abs, tag = 'smem constant byte address 0x4 - core index']
  #allocation1 [shape = 'u32[144,128]{1,0:T(1,128)}', space=vmem, size = 0x12000, scoped, tag = 'internal scratch']
  %s0 = inlined_call_operand.vmem [shape: s32[16,1], index: 0, kind: input, shape index: {}]
  %s1 = inlined_call_operand.hbm [shape: f32[32,128], index: 1, kind: input, shape index: {}]
  %s2 = inlined_call_operand.hbm [shape: f32[16,128], index: 2, kind: output, shape index: {}]
  %s3 = sld [smem:[#allocation0]]
  $region45: #{tpu_custom_call.1} parent=0
    _
  %s5 = ssub.s32 1, %s3
  %s6 = scalar_select 0, %s5, %s3
  $region1: #{tpu_custom_call.1} parent=0
    #allocation2 [shape = 'u8[16384]{0}', space=vmem, size = 0x4000, scoped, tag = 'input window, operand 1, single buffered']
    #allocation3 [shape = 's32[2]{0}', space=sflag, size = 0x8, scoped, tag = 'scoped memory for tpu_custom_call.1']
    #allocation4 [shape = 's32[2]{0}', space=sflag, size = 0x8, scoped, tag = 'scoped memory for tpu_custom_call.1']
    #allocation5 [shape = 'u8[8192]{0}', space=vmem, size = 0x2000, scoped, tag = 'output window, operand 0']
    %7 = vsyncpa [#allocation3], 0
    %8 = vsyncpa [#allocation4], 0
    %s9 = scalar_lea.sflag [#allocation4], 1
    %10 = vsyncpa %s9, 0
    loop: start=0, step=1, limit=4
    $region2: #{tpu_custom_call.1} parent=1 // loop_pre_header
      _
    $region3: #{tpu_custom_call.1} parent=1 // loop_header
      %s12 = sphi 0, %s16
      %p13 = scmp.ge.s32.totalorder %s12, 4
      %s22 = sphi 0, %s24
      %s25 = sphi 0, %s22
      %s26 = sphi 0, %s25
      %s42 = sphi 0, %s26
      %s46 = sphi 0, %s46
      %s48 = sphi 0, %s46
      %s49 = sphi 0, %s48
      %s63 = sphi 0, %s49
      %s69 = sphi 0, %s71
      %s72 = sphi 0, %s69
      %s73 = sphi 0, %s72
      %s89 = sphi 0, %s73
    $region4: #{tpu_custom_call.1} parent=1 // loop_header_branch
      %15 = sbr.rel (%p13) target = $region8
    $region5: #{tpu_custom_call.1} parent=1 // loop_body
      %s17 = ssub.s32 %s12, 1
      %s18 = ssub.s32 %s12, 2
      %s19 = sadd.s32 %s12, 1
      %s20 = ssub.s32 %s12, %s19
      %p21 = scmp.eq.s32.totalorder %s20, 0
      %s23 = sadd.s32 %s22, 1
      %s24 = scalar_select %p21, %s22, %s23
      %p27 = pneg %p21
      %p28 = scmp.eq.s32.totalorder %s12, 1
      %p29 = por %p27, %p28
      %p30 = scmp.ne.s32.totalorder %s22, %s25
      %p31 = scmp.eq.s32.totalorder %s12, 0
      %p32 = por %p30, %p31
      %p33 = scmp.ne.s32.totalorder %s22, %s25
      %p34 = scmp.eq.s32.totalorder %s17, 1
      %p35 = por %p33, %p34
      %p36 = scmp.ne.s32.totalorder %s25, %s26
      %p37 = scmp.eq.s32.totalorder %s17, 0
      %p38 = por %p36, %p37
      %p39 = scmp.ne.s32.totalorder %s25, %s26
      %p40 = scmp.eq.s32.totalorder %s18, 1
      %p41 = por %p39, %p40
      %p43 = scmp.ne.s32.totalorder %s26, %s42
      %p44 = scmp.eq.s32.totalorder %s18, 0
      %p45 = por %p43, %p44
      %s47 = sadd.s32 %s46, 1
      %p50 = scmp.eq.s32.totalorder %s12, 1
      %p51 = scmp.ne.s32.totalorder %s46, %s48
      %p52 = scmp.eq.s32.totalorder %s12, 0
      %p53 = por %p51, %p52
      %p54 = scmp.ne.s32.totalorder %s46, %s48
      %p55 = scmp.eq.s32.totalorder %s17, 1
      %p56 = por %p54, %p55
      %p57 = scmp.ne.s32.totalorder %s48, %s49
      %p58 = scmp.eq.s32.totalorder %s17, 0
      %p59 = por %p57, %p58
      %p60 = scmp.ne.s32.totalorder %s48, %s49
      %p61 = scmp.eq.s32.totalorder %s18, 1
      %p62 = por %p60, %p61
      %p64 = scmp.ne.s32.totalorder %s49, %s63
      %p65 = scmp.eq.s32.totalorder %s18, 0
      %p66 = por %p64, %p65
      %s67 = ssub.s32 %s12, %s19
      %p68 = scmp.eq.s32.totalorder %s67, 0
      %s70 = sadd.s32 %s69, 1
      %s71 = scalar_select %p68, %s69, %s70
      %p74 = pneg %p68
      %p75 = scmp.eq.s32.totalorder %s12, 1
      %p76 = por %p74, %p75
      %p77 = scmp.ne.s32.totalorder %s69, %s72
      %p78 = scmp.eq.s32.totalorder %s12, 0
      %p79 = por %p77, %p78
      %p80 = scmp.ne.s32.totalorder %s69, %s72
      %p81 = scmp.eq.s32.totalorder %s17, 1
      %p82 = por %p80, %p81
      %p83 = scmp.ne.s32.totalorder %s72, %s73
      %p84 = scmp.eq.s32.totalorder %s17, 0
      %p85 = por %p83, %p84
      %p86 = scmp.ne.s32.totalorder %s72, %s73
      %p87 = scmp.eq.s32.totalorder %s18, 1
      %p88 = por %p86, %p87
      %p90 = scmp.ne.s32.totalorder %s73, %s89
      %p91 = scmp.eq.s32.totalorder %s18, 0
      %p92 = por %p90, %p91
      %p93 = scmp.le.s32.totalorder 1, %s12
      %p94 = scmp.lt.s32.totalorder %s12, 3
      %p95 = pnand %p93, %p94
      %p96 = pneg %p95
      // Predicated region
      $region9: #{tpu_custom_call.1} parent=5 // pred_check
        _
      $region10: #{tpu_custom_call.1} parent=5 // pred_check_branch
        %98 = sbr.rel (%p95) target = $region12
      $region11: #{tpu_custom_call.1} parent=5 // pred_region
        %s99 = ssub.s32 %s12, 1
        // Predicated region
        $region13: #{tpu_custom_call.1} parent=11 // pred_check
          %p100 = pneg %p59
        $region14: #{tpu_custom_call.1} parent=11 // pred_check_branch
          %102 = sbr.rel (%p100) target = $region16
        $region15: #{tpu_custom_call.1} parent=11 // pred_region
          %s104 = ssub.s32 512, 512
          %105 = vsyncadd [#allocation3], %s104
          %s106 = sshll.u32 [#allocation2], 4
          %s107 = int_to_ptr.vmem [resolvable:$true] %s106
          %112 = dma.hbm_to_vmem [thread:$0]  %s1, 512, %s107, [#allocation3], 128, 128, 8
        $region16: #{tpu_custom_call.1} parent=11 // pred_fallthru
          _
      $region12: #{tpu_custom_call.1} parent=5 // pred_fallthru
        _
      %p113 = scmp.lt.s32.totalorder %s12, 2
      // Predicated region
      $region17: #{tpu_custom_call.1} parent=5 // pred_check
        %p114 = pneg %p113
      $region18: #{tpu_custom_call.1} parent=5 // pred_check_branch
        %116 = sbr.rel (%p114) target = $region20
      $region19: #{tpu_custom_call.1} parent=5 // pred_region
        // Predicated region
        $region21: #{tpu_custom_call.1} parent=19 // pred_check
          %p117 = pneg %p32
        $region22: #{tpu_custom_call.1} parent=19 // pred_check_branch
          %119 = sbr.rel (%p117) target = $region24
        $region23: #{tpu_custom_call.1} parent=19 // pred_region
          %p120 = scmp.lt.s32.totalorder %s12, 1
          %s121 = scalar_select %p120, %s12, 1
          %s122 = smul.addr %s121, 8
          %s123 = scalar_lea.vmem %s0, %s122
        $region24: #{tpu_custom_call.1} parent=19 // pred_fallthru
          _
      $region20: #{tpu_custom_call.1} parent=5 // pred_fallthru
        _
      %p124 = scmp.le.s32.totalorder 1, %s12
      %p125 = scmp.lt.s32.totalorder %s12, 3
      %p126 = pnand %p124, %p125
      %p127 = pneg %p126
      // Predicated region
      $region25: #{tpu_custom_call.1} parent=5 // pred_check
        _
      $region26: #{tpu_custom_call.1} parent=5 // pred_check_branch
        %129 = sbr.rel (%p126) target = $region28
      $region27: #{tpu_custom_call.1} parent=5 // pred_region
        %s130 = ssub.s32 %s12, 1
        // Predicated region
        $region29: #{tpu_custom_call.1} parent=27 // pred_check
          %p131 = pneg %p59
        $region30: #{tpu_custom_call.1} parent=27 // pred_check_branch
          %133 = sbr.rel (%p131) target = $region32
        $region31: #{tpu_custom_call.1} parent=27 // pred_region
          %134 = dma.done [#allocation3], 512
        $region32: #{tpu_custom_call.1} parent=27 // pred_fallthru
          _
        %p135 = scmp.lt.s32.totalorder %s17, 1
        %s136 = scalar_select %p135, %s17, 1
        %s137 = smul.addr %s136, 8
        %s138 = scalar_lea.vmem %s0, %s137
        %p139 = pneg %p38
        %p140 = pneg %p35
        %p141 = pneg %p59
        %p142 = pneg %p56
        %p143 = pneg %p85
        %p144 = pneg %p82
        %s145 = sand.u32 %s72, 1
        %s146 = scalar_lea.sflag [#allocation4], %s145
        %s147 = sand.u32 %s72, 1
        %s148 = smul.addr %s147, 8
        %s149 = scalar_lea.vmem [#allocation5], %s148
        %p150 = scmp.lt.s32.totalorder %s17, 1
        %s151 = scalar_select %p150, %s17, 1
        %s152 = smul.addr %s151, 8
        %s153 = scalar_lea.vmem %s0, %s152
        %v154 = vld [vmem:[%s153] sm:$0xff]
        %v155 = vlaneseq
        %v156 = vand.u32 %v155, 127
        %157 = vset.pattern.permute.xlu0 0
        %158 = vperm.xlu0 %157, %v154
        %v159 = vpop.permute.xlu0 %158
        %vm160 = vcmp.eq.s32.totalorder %v159, %v156
        %v161 = vsel %vm160, 1, 0
        %v162 = vcvt.s32.f32 %v161
        %v163 = vld [vmem:[#allocation2] sm:$0xff]
        %v164 = vld [vmem:[#allocation2 + $0x8] sm:$0xff]
        %v165 = vld [vmem:[#allocation2 + $0x10] sm:$0xff]
        %v166 = vld [vmem:[#allocation2 + $0x18] sm:$0xff]
        %vm167 = vcmask 261120
        %v169 = vsel %vm167, %v162, 0
        %171 = vmatprep.subr.mxu0 0.0
        %172 = vmatpush1.msra.mxu0 %v163
        %173 = vmatprep.subr.mxu0 0.0
        %174 = vmatpush1.msra.mxu0 %v164
        %175 = vmatprep.subr.mxu0 0.0
        %176 = vmatpush1.msra.mxu0 %v165
        %177 = vmatprep.subr.mxu0 0.0
        %178 = vmatpush1.msra.mxu0 %v166
        %179 = vmatprep.subr.mxu0 0.0
        %180 = vmatpush1.msra.mxu0 0.0
        %181 = vmatprep.subr.mxu0 0.0
        %182 = vmatpush1.msra.mxu0 0.0
        %183 = vmatprep.subr.mxu0 0.0
        %184 = vmatpush1.msra.mxu0 0.0
        %185 = vmatprep.subr.mxu0 0.0
        %186 = vmatpush1.msra.mxu0 0.0
        %187 = vmatprep.subr.mxu0 0.0
        %188 = vmatpush1.msra.mxu0 0.0
        %189 = vmatprep.subr.mxu0 0.0
        %190 = vmatpush1.msra.mxu0 0.0
        %191 = vmatprep.subr.mxu0 0.0
        %192 = vmatpush1.msra.mxu0 0.0
        %193 = vmatprep.subr.mxu0 0.0
        %194 = vmatpush1.msra.mxu0 0.0
        %195 = vmatprep.subr.mxu0 0.0
        %196 = vmatpush1.msra.mxu0 0.0
        %197 = vmatprep.subr.mxu0 0.0
        %198 = vmatpush1.msra.mxu0 0.0
        %199 = vmatprep.subr.mxu0 0.0
        %200 = vmatpush1.msra.mxu0 0.0
        %201 = vmatprep.subr.mxu0 0.0
        %202 = vmatpush1.msra.mxu0 0.0
        %203 = vmatprep.subr.mxu0 0.0
        %204 = vmatpush1.msra.mxu0 0.0
        %205 = vmatprep.subr.mxu0 0.0
        %206 = vmatpush1.msra.mxu0 0.0
        %207 = vmatprep.subr.mxu0 0.0
        %208 = vmatpush1.msra.mxu0 0.0
        %209 = vmatprep.subr.mxu0 0.0
        %210 = vmatpush1.msra.mxu0 0.0
        %211 = vmatprep.subr.mxu0 0.0
        %212 = vmatpush1.msra.mxu0 0.0
        %213 = vmatprep.subr.mxu0 0.0
        %214 = vmatpush1.msra.mxu0 0.0
        %215 = vmatprep.subr.mxu0 0.0
        %216 = vmatpush1.msra.mxu0 0.0
        %217 = vmatprep.subr.mxu0 0.0
        %218 = vmatpush1.msra.mxu0 0.0
        %219 = vmatprep.subr.mxu0 0.0
        %220 = vmatpush1.msra.mxu0 0.0
        %221 = vmatprep.subr.mxu0 0.0
        %222 = vmatpush1.msra.mxu0 0.0
        %223 = vmatprep.subr.mxu0 0.0
        %224 = vmatpush1.msra.mxu0 0.0
        %225 = vmatprep.subr.mxu0 0.0
        %226 = vmatpush1.msra.mxu0 0.0
        %227 = vmatprep.subr.mxu0 0.0
        %228 = vmatpush1.msra.mxu0 0.0
        %229 = vmatprep.subr.mxu0 0.0
        %230 = vmatpush1.msra.mxu0 0.0
        %231 = vmatprep.subr.mxu0 0.0
        %232 = vmatpush1.msra.mxu0 0.0
        %233 = vmatprep.subr.mxu0 0.0
        %234 = vmatpush1.msra.mxu0 0.0
        %235 = vmatprep.mubr.f32.mxu0 0.0
        %236 = vmatmul.mubr.f32.gmra.mrb[0].mxu0 %v169
        %v237 = vpop.f32.mrb[0].mxu0
        %v238 = vadd.f32 0.0, %v237
        %v239 = vpop.f32.mrb[0].mxu0
        %240 = vdwg.mxu0
        %v241 = vmul.f32 %v238, 11.313708
        %242 = vst [vmem:[%s149] sm:$0xff] %v241
        %s243 = sand.u32 %s72, 1
        %s244 = scalar_lea.sflag [#allocation4], %s243
        %s245 = sand.u32 %s72, 1
        %s246 = smul.addr %s245, 8
        %s247 = scalar_lea.vmem [#allocation5], %s246
        // Predicated region
        $region33: #{tpu_custom_call.1} parent=27 // pred_check
          %p248 = pneg %p82
        $region34: #{tpu_custom_call.1} parent=27 // pred_check_branch
          %250 = sbr.rel (%p248) target = $region36
        $region35: #{tpu_custom_call.1} parent=27 // pred_region
          %s252 = ssub.s32 128, 128
          %253 = vsyncadd %s244, %s252
          %s254 = smul.addr %s17, 128
          %s255 = scalar_lea.hbm %s2, %s254
          %s257 = sshll.u32 %s247, 4
          %s258 = int_to_ptr.vmem [resolvable:$true] %s257
          %260 = dma.vmem_to_hbm [thread:$0]  %s258, 128, %s255, %s244
        $region36: #{tpu_custom_call.1} parent=27 // pred_fallthru
          _
      $region28: #{tpu_custom_call.1} parent=5 // pred_fallthru
        _
      %p261 = scmp.le.s32.totalorder 2, %s12
      // Predicated region
      $region37: #{tpu_custom_call.1} parent=5 // pred_check
        %p262 = pneg %p261
      $region38: #{tpu_custom_call.1} parent=5 // pred_check_branch
        %264 = sbr.rel (%p262) target = $region40
      $region39: #{tpu_custom_call.1} parent=5 // pred_region
        %s265 = ssub.s32 %s12, 2
        // Predicated region
        $region41: #{tpu_custom_call.1} parent=39 // pred_check
          %p266 = pneg %p88
        $region42: #{tpu_custom_call.1} parent=39 // pred_check_branch
          %268 = sbr.rel (%p266) target = $region44
        $region43: #{tpu_custom_call.1} parent=39 // pred_region
          %s269 = sand.u32 %s73, 1
          %s270 = scalar_lea.sflag [#allocation4], %s269
          %s271 = sand.u32 %s73, 1
          %s272 = smul.addr %s271, 8
          %s273 = scalar_lea.vmem [#allocation5], %s272
          %274 = dma.done %s270, 128
        $region44: #{tpu_custom_call.1} parent=39 // pred_fallthru
          _
      $region40: #{tpu_custom_call.1} parent=5 // pred_fallthru
        _
    $region6: #{tpu_custom_call.1} parent=1 // loop_footer
      %s16 = sadd.s32 1, %s12
    $region7: #{tpu_custom_call.1} parent=1 // loop_footer_branch
      %11 = sbr.rel target = $region3
    $region8: #{tpu_custom_call.1} parent=1 // loop_exit
      _
    %275 = vsyncpa [#allocation3], 1
    %s276 = scalar_lea.sflag [#allocation3], 1
    %277 = vsyncpa %s276, 1
    %278 = vsyncpa [#allocation4], 1
    %s279 = scalar_lea.sflag [#allocation4], 1
    %280 = vsyncpa %s279, 1

</llo_original>
